<compile_context>
chip_gen: v5e
topology: v5e:2x2
jax: 0.10.0
libtpu: 0.0.40
codegen_flags: <defaults>
</compile_context>

<pallas_src>
import functools

import jax
import jax.numpy as jnp
from jax.experimental import pallas as pl
from jax.experimental.pallas import tpu as pltpu

_EPS = 1e-12
_SMALL_PATH_MAX_N = 256
_SMALL_PATH_VMEM_BUDGET = 8 * 1024 * 1024   # conservative across v5e/v6e/v7x
_PREPASS_VMEM_BUDGET = 8 * 1024 * 1024      # fits v5e's 16 MiB scoped default


# ---------------------------------------------------------------------------
# Small-N fused kernel: normalize + similarity + loss + mean in one block.
# ---------------------------------------------------------------------------
def _contrast_loss_small_kernel(tokens_ref, lab_col_ref, lab_row_ref, out_ref,
                                *, alpha, inv_count):
    # tokens_ref: (N, L)   lab_col_ref: (N, 1) int32   lab_row_ref: (1, N) int32
    x = tokens_ref[...].astype(jnp.float32)

    # F.normalize(tokens, dim=-1) with eps clamp (no Inf/NaN for zero rows).
    sq_norm = jnp.sum(x * x, axis=-1, keepdims=True)
    inv_norm = jax.lax.rsqrt(jnp.maximum(sq_norm, _EPS))
    xn = (x * inv_norm).astype(jnp.bfloat16)          # bf16 operands for the MXU

    # cosine similarity: contract last dim of both operands -> no transpose.
    sim = jax.lax.dot_general(
        xn, xn,
        dimension_numbers=(((1,), (1,)), ((), ())),
        preferred_element_type=jnp.float32)            # (N, N) f32

    same = lab_col_ref[...] == lab_row_ref[...]        # (N, N) via broadcast
    loss = jnp.where(same,
                     jnp.maximum(sim - alpha, 0.0),
                     1.0 - sim)

    # Single (1,1) store, executed exactly once.
    out_ref[...] = (jnp.sum(loss) * inv_count).reshape(1, 1)


# ---------------------------------------------------------------------------
# Tiled path, kernel 1: normalize rows once, emit bf16 unit vectors.
# ---------------------------------------------------------------------------
def _normalize_kernel(tokens_ref, out_ref):
    x = tokens_ref[...].astype(jnp.float32)
    sq_norm = jnp.sum(x * x, axis=-1, keepdims=True)
    inv_norm = jax.lax.rsqrt(jnp.maximum(sq_norm, _EPS))
    out_ref[...] = (x * inv_norm).astype(out_ref.dtype)


# ---------------------------------------------------------------------------
# Tiled path, kernel 2: (i, j) tile loop over the N x N loss matrix.
# ---------------------------------------------------------------------------
def _tiled_loss_kernel(row_ref, col_ref, lab_col_ref, lab_row_ref,
                       rvalid_ref, cvalid_ref, out_ref, acc_ref,
                       *, alpha, needs_mask):
    j = pl.program_id(1)

    @pl.when(j == 0)
    def _init():
        acc_ref[...] = jnp.zeros_like(acc_ref)

    # (blk, L) x (blk, L) contracted on the last dim -> (blk, blk) f32 on MXU.
    sim = jax.lax.dot_general(
        row_ref[...], col_ref[...],
        dimension_numbers=(((1,), (1,)), ((), ())),
        preferred_element_type=jnp.float32)

    same = lab_col_ref[...] == lab_row_ref[...]        # (blk,1)==(1,blk)->(blk,blk)
    loss = jnp.where(same,
                     jnp.maximum(sim - alpha, 0.0),
                     1.0 - sim)

    # Lane-dense accumulation: sublane-only (axis=0) reduction per step,
    # cross-lane reduce deferred to the wrapper.
    if needs_mask:   # static: only emitted when N was padded to a tile multiple
        # Row mask: one elementwise multiply; column mask folded into the
        # (1, blk) partial (blk multiplies).
        partial = jnp.sum(loss * rvalid_ref[...], axis=0, keepdims=True)
        partial = partial * cvalid_ref[...]
    else:
        partial = jnp.sum(loss, axis=0, keepdims=True)

    acc_ref[...] = acc_ref[...] + partial

    @pl.when(j == pl.num_programs(1) - 1)
    def _finalize():
        # Lane-dense, tile-aligned (8, blk) store, once per i tile.
        out_ref[...] = jnp.broadcast_to(acc_ref[...], out_ref.shape)


# ---------------------------------------------------------------------------
# Helpers
# ---------------------------------------------------------------------------
def _choose_prepass_block(blk, n_feat, in_itemsize):
    """Pick a prepass row-block that fits the VMEM budget (divides blk)."""
    b = blk
    while b > 8:
        # double-buffered input + double-buffered bf16 output
        working = 2 * b * n_feat * in_itemsize + 2 * b * n_feat * 2
        if working <= _PREPASS_VMEM_BUDGET:
            break
        b //= 2
    return max(b, 8)


# ---------------------------------------------------------------------------
# Wrapper
# ---------------------------------------------------------------------------
def multiclass_contrast_loss(tokens, labels, alpha=0.3, *, block=None,
                             force_tiled=None):
    """Pallas TPU implementation of MultiClass_ContrastLoss (cosine_similarity)."""
    assert tokens.ndim == 2
    assert tokens.shape[0] == labels.shape[0]
    N, L = tokens.shape
    alpha = float(alpha)

    # Byte-based gate for the fused small-N path (f32 + bf16 token copies plus
    # sim/loss intermediates), keeps the fast path safe on v7x/v5e VMEM.
    small_bytes = N * L * 6 + N * N * 12
    small_ok = (N <= _SMALL_PATH_MAX_N) and (small_bytes <= _SMALL_PATH_VMEM_BUDGET)
    use_tiled = force_tiled if force_tiled is not None else (not small_ok)

    if not use_tiled:
        # --- small-N path: one full-extent block, no grid --------------------
        lab_col = labels.reshape(N, 1).astype(jnp.int32)
        lab_row = labels.reshape(1, N).astype(jnp.int32)
        kernel = functools.partial(_contrast_loss_small_kernel,
                                   alpha=alpha, inv_count=1.0 / (N * N))
        out = pl.pallas_call(
            kernel,
            out_shape=jax.ShapeDtypeStruct((1, 1), jnp.float32),
            in_specs=[
                pl.BlockSpec((N, L), lambda: (0, 0)),
                pl.BlockSpec((N, 1), lambda: (0, 0)),
                pl.BlockSpec((1, N), lambda: (0, 0)),
            ],
            out_specs=pl.BlockSpec((1, 1), lambda: (0, 0)),
        )(tokens, lab_col, lab_row)
        return out[0, 0]

    # --- tiled path -----------------------------------------------------------
    if block is None:
        blk = 512 if L <= 512 else 256          # MXU-aligned, >= 256
    else:
        blk = int(block)
    n_tiles = (N + blk - 1) // blk
    n_pad = n_tiles * blk
    pad = n_pad - N
    needs_mask = pad > 0

    # Pad in the ORIGINAL dtype (no extra f32 HBM copy); f32 cast is in-kernel.
    tok_p = jnp.pad(tokens, ((0, pad), (0, 0)))
    lab_p = jnp.pad(labels.astype(jnp.int32), (0, pad))
    lab_col = lab_p.reshape(n_pad, 1)
    lab_row = lab_p.reshape(1, n_pad)
    valid = (jnp.arange(n_pad) < N).astype(jnp.float32)
    val_col = valid.reshape(n_pad, 1)
    val_row = valid.reshape(1, n_pad)

    # 1) normalize once -> bf16 unit vectors (halves HBM bytes for the loop).
    blk_pre = _choose_prepass_block(blk, L, jnp.dtype(tok_p.dtype).itemsize)
    xn = pl.pallas_call(
        _normalize_kernel,
        out_shape=jax.ShapeDtypeStruct((n_pad, L), jnp.bfloat16),
        grid_spec=pltpu.PrefetchScalarGridSpec(
            num_scalar_prefetch=0,
            grid=(n_pad // blk_pre,),
            in_specs=[pl.BlockSpec((blk_pre, L), lambda i: (i, 0))],
            out_specs=pl.BlockSpec((blk_pre, L), lambda i: (i, 0)),
        ),
        compiler_params=pltpu.CompilerParams(
            dimension_semantics=("parallel",)),
    )(tok_p)

    # 2) (i, j) tile loop; per-i-tile (1, blk) partials (i "parallel",
    #    j innermost "arbitrary"; row tile j-invariant, output resident in j).
    kernel = functools.partial(_tiled_loss_kernel, alpha=alpha,
                               needs_mask=needs_mask)
    partials = pl.pallas_call(
        kernel,
        out_shape=jax.ShapeDtypeStruct((n_tiles * 8, blk), jnp.float32),
        grid_spec=pltpu.PrefetchScalarGridSpec(
            num_scalar_prefetch=0,
            grid=(n_tiles, n_tiles),
            in_specs=[
                pl.BlockSpec((blk, L), lambda i, j: (i, 0)),   # row tile: j-invariant
                pl.BlockSpec((blk, L), lambda i, j: (j, 0)),   # col tile
                pl.BlockSpec((blk, 1), lambda i, j: (i, 0)),   # row labels
                pl.BlockSpec((1, blk), lambda i, j: (0, j)),   # col labels
                pl.BlockSpec((blk, 1), lambda i, j: (i, 0)),   # row validity
                pl.BlockSpec((1, blk), lambda i, j: (0, j)),   # col validity
            ],
            out_specs=pl.BlockSpec((8, blk), lambda i, j: (i, 0)),
            scratch_shapes=[pltpu.VMEM((1, blk), jnp.float32)],
        ),
        compiler_params=pltpu.CompilerParams(
            dimension_semantics=("parallel", "arbitrary")),
    )(xn, xn, lab_col, lab_row, val_col, val_row)

    # One replicated (1, blk) partial per i tile (rows 0, 8, 16, ...).
    total = jnp.sum(partials[::8, :])
    return total / jnp.float32(N * N)


# ---------------------------------------------------------------------------
# Pure-JAX reference (f32) matching the PyTorch module.
# ---------------------------------------------------------------------------
def _reference_loss(tokens, labels, alpha=0.3):
    x = tokens.astype(jnp.float32)
    norm = jnp.sqrt(jnp.sum(x * x, axis=-1, keepdims=True))
    xn = x / jnp.maximum(norm, _EPS)
    sim = xn @ xn.T
    diff = labels[:, None] - labels[None, :]
    loss = jnp.where(diff != 0, 1.0 - sim, jnp.maximum(sim - alpha, 0.0))
    return jnp.mean(loss)


# TODO(synk): distance='l2' branch (torch.cdist) not implemented; module default
# is cosine_similarity, which is what this kernel covers.

if __name__ == "__main__":
    key = jax.random.PRNGKey(0)
    k1, k2, k3, k4 = jax.random.split(key, 4)

    # Small case, matches the module interface: tokens (N, L), labels (N,).
    N, L = 8, 32
    tokens = jax.random.normal(k1, (N, L), dtype=jnp.float32)
    labels = jax.random.randint(k2, (N,), 0, 3, dtype=jnp.int32)
    loss = jax.block_until_ready(multiclass_contrast_loss(tokens, labels, alpha=0.3))
    ref = _reference_loss(tokens, labels, alpha=0.3)
    assert jnp.allclose(loss, ref, atol=1e-2, rtol=1e-2), (loss, ref)

    # Moderate case to exercise the tiled (grid) path: multiple tiles, padding
    # mask, lane-dense accumulator, j-accumulation.
    N2, L2 = 300, 96
    tokens2 = jax.random.normal(k3, (N2, L2), dtype=jnp.float32)
    labels2 = jax.random.randint(k4, (N2,), 0, 5, dtype=jnp.int32)
    loss2 = jax.block_until_ready(
        multiclass_contrast_loss(tokens2, labels2, alpha=0.3, block=256,
                                 force_tiled=True))
    ref2 = _reference_loss(tokens2, labels2, alpha=0.3)
    assert jnp.allclose(loss2, ref2, atol=1e-2, rtol=1e-2), (loss2, ref2)

    print("KERNEL_OK")
</pallas_src>

<mosaic_0001>
module attributes {stable_mosaic.version = 11 : i64} {
  func.func @_contrast_loss_small_kernel(%arg0: memref<8x32xf32, #tpu.memory_space<vmem>>, %arg1: memref<8x1xi32, #tpu.memory_space<vmem>>, %arg2: memref<1x8xi32, #tpu.memory_space<vmem>>, %arg3: memref<1x1xf32, #tpu.memory_space<vmem>>) attributes {dimension_semantics = [], scalar_prefetch = 0 : i64, scratch_operands = 0 : i64, tpu.core_type = #tpu.core_type<tc>} {
    %c0 = arith.constant 0 : index
    %c0_0 = arith.constant 0 : index
    %0 = vector.load %arg0[%c0, %c0_0] : memref<8x32xf32, #tpu.memory_space<vmem>>, vector<8x32xf32>
    %1 = arith.mulf %0, %0 : vector<8x32xf32>
    %cst = arith.constant dense<0.000000e+00> : vector<8xf32>
    %2 = vector.multi_reduction <add>, %1, %cst [1] : vector<8x32xf32> to vector<8xf32>
    %3 = vector.shape_cast %2 : vector<8xf32> to vector<8x1xf32>
    %cst_1 = arith.constant 9.99999996E-13 : f32
    %4 = vector.broadcast %cst_1 : f32 to vector<8x1xf32>
    %5 = arith.maximumf %3, %4 : vector<8x1xf32>
    %6 = math.rsqrt %5 : vector<8x1xf32>
    %7 = vector.broadcast %6 : vector<8x1xf32> to vector<8x32xf32>
    %8 = arith.mulf %0, %7 : vector<8x32xf32>
    %9 = arith.truncf %8 : vector<8x32xf32> to vector<8x32xbf16>
    %cst_2 = arith.constant dense<0.000000e+00> : vector<8x8xf32>
    %10 = tpu.matmul %9, %9, %cst_2 {dimension_numbers = #tpu.dot_dimension_numbers<[1], [1], [0], [0], [0, 0, 1, 0], [], []>} : vector<8x32xbf16>, vector<8x32xbf16>, vector<8x8xf32> -> vector<8x8xf32>
    %c0_3 = arith.constant 0 : index
    %c0_4 = arith.constant 0 : index
    %11 = vector.load %arg1[%c0_3, %c0_4] : memref<8x1xi32, #tpu.memory_space<vmem>>, vector<8x1xi32>
    %c0_5 = arith.constant 0 : index
    %c0_6 = arith.constant 0 : index
    %12 = vector.load %arg2[%c0_5, %c0_6] : memref<1x8xi32, #tpu.memory_space<vmem>>, vector<1x8xi32>
    %13 = vector.broadcast %11 : vector<8x1xi32> to vector<8x8xi32>
    %14 = vector.broadcast %12 : vector<1x8xi32> to vector<8x8xi32>
    %15 = arith.cmpi eq, %13, %14 : vector<8x8xi32>
    %cst_7 = arith.constant 3.000000e-01 : f32
    %16 = vector.broadcast %cst_7 : f32 to vector<8x8xf32>
    %17 = arith.subf %10, %16 : vector<8x8xf32>
    %cst_8 = arith.constant 0.000000e+00 : f32
    %18 = vector.broadcast %cst_8 : f32 to vector<8x8xf32>
    %19 = arith.maximumf %17, %18 : vector<8x8xf32>
    %cst_9 = arith.constant 1.000000e+00 : f32
    %20 = vector.broadcast %cst_9 : f32 to vector<8x8xf32>
    %21 = arith.subf %20, %10 : vector<8x8xf32>
    %22 = arith.select %15, %19, %21 : vector<8x8xi1>, vector<8x8xf32>
    %23 = vector.shape_cast %22 : vector<8x8xf32> to vector<1x8x8xf32>
    %cst_10 = arith.constant dense<0.000000e+00> : vector<1xf32>
    %24 = vector.multi_reduction <add>, %23, %cst_10 [1, 2] : vector<1x8x8xf32> to vector<1xf32>
    %25 = vector.shape_cast %24 : vector<1xf32> to vector<1x1x1xf32>
    %26 = vector.extract %25[0, 0, 0] : f32 from vector<1x1x1xf32>
    %cst_11 = arith.constant 1.562500e-02 : f32
    %27 = arith.mulf %26, %cst_11 : f32
    %28 = vector.broadcast %27 : f32 to vector<1x1xf32>
    %c0_12 = arith.constant 0 : index
    %c0_13 = arith.constant 0 : index
    %29 = vector.load %arg3[%c0_12, %c0_13] : memref<1x1xf32, #tpu.memory_space<vmem>>, vector<1x1xf32>
    tpu.vector_store %arg3[%c0_12, %c0_13], %28 {strides = array<i32>} : memref<1x1xf32, #tpu.memory_space<vmem>>, vector<1x1xf32>,
    return
  }
}

</mosaic_0001>

<llo_original>
// kernel: tpu_custom_call.1
$region0: #{tpu_custom_call.1}
  #allocation0 [shape = 'u32[]', space=smem, size = 0x4, offset = 0x4, fixed_abs, tag = 'smem constant byte address 0x4 - core index']
  #allocation1 [shape = 'u32[72,128]{1,0:T(1,128)}', space=vmem, size = 0x9000, scoped, tag = 'internal scratch']
  %s0 = inlined_call_operand.vmem [shape: f32[8,32], index: 0, kind: input, shape index: {}]
  %s1 = inlined_call_operand.vmem [shape: s32[8,1], index: 1, kind: input, shape index: {}]
  %s2 = inlined_call_operand.vmem [shape: s32[1,8], index: 2, kind: input, shape index: {}]
  %s3 = inlined_call_operand.hbm [shape: f32[1,1], index: 3, kind: output, shape index: {}]
  %s4 = sld [smem:[#allocation0]]
  $region22: #{tpu_custom_call.1} parent=0
    _
  %s6 = ssub.s32 1, %s4
  %s7 = scalar_select 0, %s6, %s4
  $region1: #{tpu_custom_call.1} parent=0
    #allocation2 [shape = 'u8[512]{0}', space=vmem, size = 0x400, scoped, tag = 'output window, operand 0, single buffered']
    #allocation3 [shape = 's32[1]{0}', space=sflag, size = 0x4, scoped, tag = 'scoped memory for tpu_custom_call.1']
    %8 = vsyncpa [#allocation3], 0
    // Predicated region
    $region2: #{tpu_custom_call.1} parent=1 // pred_check
      _
    $region3: #{tpu_custom_call.1} parent=1 // pred_check_branch
      %10 = sbr.rel (0) target = $region5
    $region4: #{tpu_custom_call.1} parent=1 // pred_region
      _
    $region5: #{tpu_custom_call.1} parent=1 // pred_fallthru
      _
    // Predicated region
    $region6: #{tpu_custom_call.1} parent=1 // pred_check
      _
    $region7: #{tpu_custom_call.1} parent=1 // pred_check_branch
      %12 = sbr.rel (0) target = $region9
    $region8: #{tpu_custom_call.1} parent=1 // pred_region
      _
    $region9: #{tpu_custom_call.1} parent=1 // pred_fallthru
      _
    // Predicated region
    $region10: #{tpu_custom_call.1} parent=1 // pred_check
      _
    $region11: #{tpu_custom_call.1} parent=1 // pred_check_branch
      %14 = sbr.rel (0) target = $region13
    $region12: #{tpu_custom_call.1} parent=1 // pred_region
      _
    $region13: #{tpu_custom_call.1} parent=1 // pred_fallthru
      _
    %v16 = vld [vmem:[%s0] sm:$0xff]
    %v17 = vmul.f32 %v16, %v16
    %vm18 = vcmask 261120
    %v19 = vsel %vm18, %v17, 0.0
    %20 = vadd.xlane.f32.xlu0 %v19
    %v21 = vpop.xlane.xlu0 %20
    %v22 = vmax.f32 %v21, 1e-12
    %v23 = vrsqrt.pop %v22
    %v24 = vmul.f32 %v23, %v22
    %v25 = vmul.f32 %v24, %v23
    %v26 = vmul.f32 0.5, %v25
    %v27 = vsub.f32 1.5, %v26
    %v28 = vmul.f32 %v23, %v27
    %vm29 = vweird.f32 %v22
    %vm30 = vweird.f32 %v23
    %vm31 = vmor %vm29, %vm30
    %v32 = vsel %vm31, %v23, %v28
    %v33 = vmul.f32 %v16, %v32
    %v34 = vpack.c.bf16 %v33, %v33
    %v36 = vsel %vm18, %v34, 0
    %38 = vmatpush.bf16.xpose.msra.mxu0 0
    %39 = vmatpush.bf16.xpose.msra.mxu0 0
    %40 = vmatpush.bf16.xpose.msra.mxu0 0
    %41 = vmatpush.bf16.xpose.msra.mxu0 0
    %42 = vmatpush.bf16.xpose.msra.mxu0 0
    %43 = vmatpush.bf16.xpose.msra.mxu0 0
    %44 = vmatpush.bf16.xpose.msra.mxu0 0
    %45 = vmatpush.bf16.xpose.msra.mxu0 %v36
    %46 = vmatmul.bf16.gmra.mxu0 %v36
    %v47 = vpop.f32.mrf.mxu0
    %v48 = vadd.f32 0.0, %v47
    %v49 = vpop.f32.mrf.mxu0
    %50 = vdwg.mxu0
    %v51 = vld [vmem:[%s1] sm:$0xff]
    %v52 = vld [vmem:[%s2] sm:$0x1]
    %53 = vset.pattern.permute.xlu0 0
    %54 = vperm.xlu0 %53, %v51
    %v55 = vpop.permute.xlu0 %54
    %v56 = vperm.slane %v52, 0
    %vm57 = vcmp.eq.s32.totalorder %v55, %v56
    %v58 = vsub.f32 %v48, 0.3
    %v59 = vmax.f32 %v58, 0.0
    %v60 = vsub.f32 1.0, %v48
    %v61 = vsel %vm57, %v59, %v60
    %vm62 = vcmask 64512
    %v63 = vsel %vm62, %v61, 0.0
    %64 = vadd.xlane.f32.xlu0 %v63
    %v65 = vpop.xlane.xlu0 %64
    %v66 = vrot.slane %v65, 4
    %v67 = vadd.f32 %v65, %v66
    %v68 = vrot.slane %v67, 2
    %v69 = vadd.f32 %v67, %v68
    %v70 = vrot.slane %v69, 1
    %v71 = vadd.f32 %v69, %v70
    %s72 = vtos %v71
    %s73 = smul.f32 %s72, 0.015625
    %v74 = vstv %s73
    %vm75 = vcmask 0
    %76 = vst.msk [vmem:[#allocation2] sm:$0x1] %vm75, %v74
    // Predicated region
    $region14: #{tpu_custom_call.1} parent=1 // pred_check
      _
    $region15: #{tpu_custom_call.1} parent=1 // pred_check_branch
      %78 = sbr.rel (0) target = $region17
    $region16: #{tpu_custom_call.1} parent=1 // pred_region
      %80 = vsyncadd [#allocation3], 0
      %s82 = sshll.u32 [#allocation2], 4
      %s83 = int_to_ptr.vmem [resolvable:$true] %s82
      %s84 = sshll.u32 %s3, 4
      %s85 = int_to_ptr.hbm [resolvable:$true] %s84
      %87 = dma.vmem_to_hbm [thread:$0]  %s83, 16, %s85, [#allocation3]
    $region17: #{tpu_custom_call.1} parent=1 // pred_fallthru
      _
    // Predicated region
    $region18: #{tpu_custom_call.1} parent=1 // pred_check
      _
    $region19: #{tpu_custom_call.1} parent=1 // pred_check_branch
      %89 = sbr.rel (0) target = $region21
    $region20: #{tpu_custom_call.1} parent=1 // pred_region
      %91 = dma.done [#allocation3], 16
    $region21: #{tpu_custom_call.1} parent=1 // pred_fallthru
      _
    %92 = vsyncpa [#allocation3], 1

</llo_original>
